<compile_context>
chip_gen: v7x
topology: tpu7x:2x2x1
jax: 0.10.0
libtpu: 0.0.40
codegen_flags: <defaults>
</compile_context>

<pallas_src>
import math
import numpy as np
import jax
import jax.numpy as jnp
from jax import lax
from jax.experimental import pallas as pl
from jax.experimental.pallas import tpu as pltpu

# ---------------- configuration (small synthetic shapes) ----------------
B = 2            # batch
NCAM = 3         # cameras per sample
C_IN = 4         # image channels
HS = 16          # source (per-camera BEV) grid rows    (original: 200)
WS = 16          # source grid cols                     (original: 196)
H1 = 16          # "frontend" feature channels
H2 = 32          # "transformer" (BEV) feature channels
C_TD = 32        # "topdown" feature channels           (original: 256)
MAP_EXTENTS = (-4.0, -2.0, 4.0, 2.0)                    # x1, y1, x2, y2
MAP_RESOLUTION = 1.0
SCENE_LEN = (MAP_EXTENTS[3] - MAP_EXTENTS[1]) * 4.0     # 16.0
SIZE_SIDE = int(SCENE_LEN / MAP_RESOLUTION)             # 16
S_SRC = HS * WS                                         # 256
S_DST = SIZE_SIDE * SIZE_SIDE                           # 256
P_TOTAL = B * NCAM * S_SRC                              # 1536 pixels total

# Pixel tile for the per-pixel chain: lane axis, multiple of 128.  P=1536 -> 6
# grid steps (even -> balanced v7x megacore split, enough steps to reach
# pipeline steady state).  At real P use 512-1024.
TP = 256
# Source-column tile for the fusion reduction axis (degenerate == S_SRC at toy
# shapes); sweep larger on v5e/v6e (128 MiB VMEM) at production shapes.
S_TILE = 256


# ======================= Pallas kernel 1: feature chain =======================
# Channel-major per-pixel MLP.  All biases are folded into the weights via an
# augmented ones row (host side) and the classifier weight is folded into the
# last layer, so the kernel is three bf16 dots (f32 accumulation) + two relus
# and emits a single lane-dense (1, TP) f32 row per tile.
def feature_chain_kernel(x_ref, w1_ref, w2_ref, w3_ref, o_ref):
    x = x_ref[...]                                                    # (C_IN+1, TP) bf16
    h1 = jnp.maximum(
        jnp.dot(w1_ref[...], x, preferred_element_type=jnp.float32), 0.0)
    h2 = jnp.maximum(
        jnp.dot(w2_ref[...], h1.astype(jnp.bfloat16),
                preferred_element_type=jnp.float32), 0.0)
    o_ref[...] = jnp.dot(w3_ref[...], h2.astype(jnp.bfloat16),
                         preferred_element_type=jnp.float32)


def feature_chain(x_aug, w1a, w2a, w3a):
    """x_aug: (C_IN+1, P) bf16 channel-major pixels (last row == 1).
    Returns (1, P) f32 folded per-pixel class features."""
    c_aug, P = x_aug.shape
    assert P % TP == 0
    return pl.pallas_call(
        feature_chain_kernel,
        out_shape=jax.ShapeDtypeStruct((1, P), jnp.float32),
        grid_spec=pltpu.PrefetchScalarGridSpec(
            num_scalar_prefetch=0,
            grid=(P // TP,),
            in_specs=[
                pl.BlockSpec((c_aug, TP), lambda i: (0, i)),
                pl.BlockSpec(w1a.shape, lambda i: (0, 0)),
                pl.BlockSpec(w2a.shape, lambda i: (0, 0)),
                pl.BlockSpec(w3a.shape, lambda i: (0, 0)),
            ],
            out_specs=pl.BlockSpec((1, TP), lambda i: (0, i)),
        ),
        compiler_params=pltpu.CompilerParams(dimension_semantics=("parallel",)),
    )(x_aug, w1a, w2a, w3a)


# ===================== Pallas kernel 2: scatter fusion ====================
# Scatter-add of the per-camera classified scalar source features into the ego
# grid, driven by an int32 destination-index table.  The one-hot row block is
# built in-register (iota compare) and reduced into the resident per-batch
# output block with an f32 dot; padded cameras are skipped via a
# scalar-prefetched valid-camera count.  At the last step we divide by the
# host-precomputed visit counts and add the classifier bias (SMEM).
def fusion_kernel(nvalid_ref, cls_ref, dst_ref, cnt_ref, bcls_ref, out_ref):
    b = pl.program_id(0)
    cam = pl.program_id(1)
    st = pl.program_id(2)

    @pl.when((cam == 0) & (st == 0))
    def _():
        out_ref[...] = jnp.zeros_like(out_ref)

    @pl.when(cam < nvalid_ref[b])
    def _():
        cls = cls_ref[0, 0]                                  # (1, S_TILE) f32
        dstcol = dst_ref[0, 0]                               # (S_TILE, 1) int32
        col_ids = lax.broadcasted_iota(jnp.int32, (S_TILE, S_DST), 1)
        onehot = jnp.where(dstcol == col_ids, 1.0, 0.0)      # (S_TILE, S_DST) f32
        out_ref[...] += jnp.dot(
            cls, onehot, preferred_element_type=jnp.float32).reshape(out_ref.shape)

    @pl.when((cam == pl.num_programs(1) - 1) & (st == pl.num_programs(2) - 1))
    def _():
        counts = cnt_ref[...]                                # (1, 1, S_DST)
        denom = jnp.where(counts >= 1.0, counts, 1.0)
        out_ref[...] = out_ref[...] / denom + bcls_ref[0, 0]


def fusion(n_valid, cls_src, dst_idx, counts, b_cls):
    Bv, ncam, _, s_src = cls_src.shape
    s_dst = counts.shape[-1]
    assert s_src % S_TILE == 0
    n_st = s_src // S_TILE

    def clamp_cam(c, nv, b):
        # clamp to the last valid camera -> unchanged block index, DMA skipped
        return jnp.maximum(jnp.minimum(c, nv[b] - 1), 0)

    def cls_map(b, c, t, nv):
        return (b, clamp_cam(c, nv, b), t, 0)

    def dst_map(b, c, t, nv):
        return (b, clamp_cam(c, nv, b), t, 0)

    def cnt_map(b, c, t, nv):
        return (b, 0, 0)

    def out_map(b, c, t, nv):
        return (b, 0, 0)

    out = pl.pallas_call(
        fusion_kernel,
        out_shape=jax.ShapeDtypeStruct((Bv, 1, s_dst), jnp.float32),
        grid_spec=pltpu.PrefetchScalarGridSpec(
            num_scalar_prefetch=1,
            grid=(Bv, ncam, n_st),
            in_specs=[
                pl.BlockSpec((1, 1, 1, S_TILE), cls_map),
                pl.BlockSpec((1, 1, S_TILE, 1), dst_map),
                pl.BlockSpec((1, 1, s_dst), cnt_map),
                pl.BlockSpec(memory_space=pltpu.MemorySpace.SMEM),
            ],
            out_specs=pl.BlockSpec((1, 1, s_dst), out_map),
        ),
        compiler_params=pltpu.CompilerParams(
            dimension_semantics=("parallel", "arbitrary", "arbitrary")),
    )(n_valid, cls_src, dst_idx, counts, b_cls)
    return out.reshape(Bv, 1, SIZE_SIDE, SIZE_SIDE)


# ============================== glue (index math) ==============================
def pose_to_mat(p):
    x, y, th = float(p[0]), float(p[1]), float(p[2])
    c, s = math.cos(th), math.sin(th)
    return np.array([[c, -s, x], [s, c, y], [0.0, 0.0, 1.0]], dtype=np.float64)


def x1_to_x2(p1, p2):
    # transform taking coordinates in frame p1 into frame p2 (SE(2), homogeneous 3x3)
    return (np.linalg.inv(pose_to_mat(p2)) @ pose_to_mat(p1)).astype(np.float32)


def make_logits_coordinates():
    ii, jj = np.meshgrid(np.arange(HS), np.arange(WS), indexing="ij")
    x_cam = (jj - WS / 2 + 0.5) * MAP_RESOLUTION      # lateral
    y_cam = (ii - HS / 2 + 0.5) * MAP_RESOLUTION      # forward
    return np.stack([x_cam.ravel(), y_cam.ravel(), np.ones(S_SRC)], 0).astype(np.float32)


def compute_valid_cams(cam_images_np):
    # replicate the torch truncation: cams are used up to (excluding) the first all-zero image
    valid = np.zeros((B, NCAM), dtype=bool)
    for b in range(B):
        for c in range(NCAM):
            if np.count_nonzero(cam_images_np[b, c]) == 0:
                break
            valid[b, c] = True
    return valid


def build_dst_idx(cam_positions_np, ego_position_np, logits_coords, single_mask_np, valid):
    """Destination ego cell (-1 = dropped) for every source cell, in natural
    (h, w) row-major source order.  The torch gather swap (feature at td[:, j, i]
    for logits coordinate k=i*WS+j) is folded into this index table."""
    assert HS == WS  # the (ids[1], ids[0]) gather swap is folded via a square transpose here
    mask_flat = single_mask_np.reshape(-1)
    dst = np.full((B, NCAM, S_SRC), -1, dtype=np.int32)
    lc64 = logits_coords.astype(np.float64)
    for b in range(B):
        for c in range(NCAM):
            if not valid[b, c]:
                continue
            M = x1_to_x2(cam_positions_np[b, c], ego_position_np[b])
            ego = M.astype(np.float64) @ lc64                         # (3, S_SRC), col k=i*WS+j
            idx = np.round((ego + SCENE_LEN / 2.0) / MAP_RESOLUTION).astype(np.int64)
            inb = (idx[0] >= 0) & (idx[0] < SIZE_SIDE) & (idx[1] >= 0) & (idx[1] < SIZE_SIDE)
            keep = mask_flat & inb
            d_k = np.where(keep, idx[0] * SIZE_SIDE + idx[1], -1).astype(np.int32)
            # permute torch order k=i*WS+j -> natural source order s=h*WS+w (h=j, w=i)
            dst[b, c] = d_k.reshape(HS, WS).T.reshape(-1)
    return dst


def build_counts(dst):
    """Per-destination visit counts (B, 1, S_DST) from the dst index table."""
    counts = np.zeros((B, 1, S_DST), np.float32)
    for b in range(B):
        d = dst[b].reshape(-1)
        d = d[d >= 0]
        counts[b, 0] = np.bincount(d, minlength=S_DST).astype(np.float32)
    return counts


# ============================ numpy reference model ============================
def reference_forward(cam_images_np, cam_positions_np, ego_position_np, single_mask_np,
                      params_np, cls_params_np, logits_coords, valid):
    w1, b1, w2, b2, w3, b3 = params_np
    w_cls, b_cls = cls_params_np
    relu = lambda v: np.maximum(v, 0.0)
    out = np.zeros((B, 1, SIZE_SIDE, SIZE_SIDE), np.float32)
    mask_flat = single_mask_np.reshape(-1)
    for b in range(B):
        n_used = int(valid[b].sum())
        # per-pixel MLP -> td feats (NCAM, C_TD, HS, WS)
        x = cam_images_np[b].transpose(0, 2, 3, 1).reshape(-1, C_IN)
        td = (relu(relu(x @ w1 + b1) @ w2 + b2) @ w3 + b3)
        td = td.reshape(NCAM, HS, WS, C_TD).transpose(0, 3, 1, 2)
        full = np.zeros((C_TD, SIZE_SIDE, SIZE_SIDE), np.float64)
        times = np.zeros((SIZE_SIDE, SIZE_SIDE), np.float64)
        ids_full = np.stack(np.meshgrid(np.arange(HS), np.arange(WS), indexing="ij")).reshape(2, -1)
        for c in range(n_used):
            M = x1_to_x2(cam_positions_np[b, c], ego_position_np[b])
            ego = M.astype(np.float64) @ logits_coords
            e = np.round((ego + SCENE_LEN / 2.0) / MAP_RESOLUTION).astype(np.int64)
            ids = ids_full[:, mask_flat]
            e = e[:, mask_flat]
            ix = (e[0] >= 0) & (e[0] < SIZE_SIDE) & (e[1] >= 0) & (e[1] < SIZE_SIDE)
            e = e[:, ix]
            ids = ids[:, ix]
            for t in range(e.shape[1]):
                full[:, e[0, t], e[1, t]] += td[c, :, ids[1, t], ids[0, t]]
                times[e[0, t], e[1, t]] += 1.0
        sel = times >= 1
        full[:, sel] /= times[sel]
        logits = w_cls @ full.reshape(C_TD, -1) + b_cls
        out[b, 0] = logits.reshape(SIZE_SIDE, SIZE_SIDE).astype(np.float32)
    return out


# =================================== main ===================================
if __name__ == "__main__":
    key = jax.random.PRNGKey(0)
    ks = jax.random.split(key, 16)

    # --- inputs (the forward's arguments) ---
    cam_images = jax.random.normal(ks[0], (B, NCAM, C_IN, HS, WS), dtype=jnp.float32)
    cam_images = cam_images.at[1, 2].set(0.0)       # exercise the zero-camera truncation
    cam_calibs = jax.random.normal(ks[1], (B, NCAM, 3, 3), dtype=jnp.float32)  # unused (see TODO)
    cam_positions = jax.random.uniform(ks[2], (B, NCAM, 3), minval=-1.0, maxval=1.0)
    cam_positions = cam_positions * jnp.array([1.0, 1.0, 0.3])
    ego_position = jax.random.uniform(ks[3], (B, 3), minval=-0.5, maxval=0.5)
    ego_position = ego_position * jnp.array([1.0, 1.0, 0.2])
    ii, jj = np.meshgrid(np.arange(HS), np.arange(WS), indexing="ij")
    single_mask_np = ((ii * 3 + jj) % 7 != 0)       # deterministic boolean mask (HS, WS)

    # --- deterministic parameters (synthetic sub-modules) ---
    w1 = jax.random.normal(ks[4], (C_IN, H1)) * 0.3
    b1 = jax.random.normal(ks[5], (1, H1)) * 0.1
    w2 = jax.random.normal(ks[6], (H1, H2)) * 0.3
    b2 = jax.random.normal(ks[7], (1, H2)) * 0.1
    w3 = jax.random.normal(ks[8], (H2, C_TD)) * 0.3
    b3 = jax.random.normal(ks[9], (1, C_TD)) * 0.1
    w_cls = jax.random.normal(ks[10], (1, C_TD)) * 0.3
    b_cls = jax.random.normal(ks[11], (1, 1)) * 0.1

    params_np32 = tuple(np.asarray(p, np.float32) for p in (w1, b1, w2, b2, w3, b3))
    w_cls_np = np.asarray(w_cls, np.float32)
    b_cls_np = np.asarray(b_cls, np.float32)
    logits_coords = make_logits_coordinates()

    cam_images_np = np.asarray(cam_images)
    cam_positions_np = np.asarray(cam_positions)
    ego_position_np = np.asarray(ego_position)
    valid = compute_valid_cams(cam_images_np)
    n_valid = jnp.asarray(valid.sum(axis=1).astype(np.int32))          # (B,)

    # ---- host-side weight folding (biases + classifier) ----
    w1_np, b1_np, w2_np, b2_np, w3_np, b3_np = params_np32
    W1A = np.concatenate([w1_np.T, b1_np.T], axis=1)                   # (H1, C_IN+1)
    unit1 = np.zeros((1, C_IN + 1), np.float32); unit1[0, -1] = 1.0
    W1A = np.concatenate([W1A, unit1], axis=0)                         # (H1+1, C_IN+1)
    W2A = np.concatenate([w2_np.T, b2_np.T], axis=1)                   # (H2, H1+1)
    unit2 = np.zeros((1, H1 + 1), np.float32); unit2[0, -1] = 1.0
    W2A = np.concatenate([W2A, unit2], axis=0)                         # (H2+1, H1+1)
    w3c = (w3_np @ w_cls_np.T).T                                       # (1, H2)   classifier fold
    b3c = b3_np @ w_cls_np.T                                           # (1, 1)    (b_cls added later)
    W3A = np.concatenate([w3c, b3c], axis=1)                           # (1, H2+1)

    w1a = jnp.asarray(W1A, jnp.bfloat16)
    w2a = jnp.asarray(W2A, jnp.bfloat16)
    w3a = jnp.asarray(W3A, jnp.bfloat16)

    # ---- stage 1: frontend/transformer/topdown + classifier fold (Pallas) ----
    x_cm = jnp.transpose(cam_images.reshape(B, NCAM, C_IN, S_SRC),
                         (2, 0, 1, 3)).reshape(C_IN, P_TOTAL)          # (C_IN, P) channel-major
    x_aug = jnp.concatenate([x_cm, jnp.ones((1, P_TOTAL), x_cm.dtype)],
                            axis=0).astype(jnp.bfloat16)               # (C_IN+1, P)
    cls_flat = feature_chain(x_aug, w1a, w2a, w3a)                     # (1, P) f32
    cls_src = cls_flat.reshape(B, NCAM, 1, S_SRC)                      # fusion layout (lane-dense)

    # ---- stage 2: index math glue (SE(2), rounding, masking, bounds, counts) ----
    dst = build_dst_idx(cam_positions_np, ego_position_np, logits_coords,
                        single_mask_np, valid)                         # (B, NCAM, S_SRC) int32
    counts_np = build_counts(dst)
    dst_idx = jnp.asarray(dst.reshape(B, NCAM, S_SRC, 1), dtype=jnp.int32)
    counts = jnp.asarray(counts_np)                                    # (B, 1, S_DST) f32

    # ---- stage 3: index-driven scatter fusion + averaging + bias (Pallas) ----
    batch_logits = fusion(n_valid, cls_src, dst_idx, counts, jnp.asarray(b_cls_np))
    batch_logits = jax.block_until_ready(batch_logits)

    # ---- numpy reference check (unfused, float64) ----
    params_np64 = tuple(np.asarray(p, np.float64) for p in params_np32)
    ref = reference_forward(cam_images_np, cam_positions_np, ego_position_np, single_mask_np,
                            params_np64,
                            (w_cls_np.astype(np.float64), b_cls_np.astype(np.float64)),
                            logits_coords.astype(np.float64), valid)
    np.testing.assert_allclose(np.asarray(batch_logits), ref, rtol=5e-2, atol=5e-2)

    print("KERNEL_OK")
</pallas_src>

<mosaic_0001>
module attributes {stable_mosaic.version = 11 : i64} {
  func.func @feature_chain_kernel(%arg0: i32, %arg1: memref<5x256xbf16, #tpu.memory_space<vmem>>, %arg2: memref<17x5xbf16, #tpu.memory_space<vmem>>, %arg3: memref<33x17xbf16, #tpu.memory_space<vmem>>, %arg4: memref<1x33xbf16, #tpu.memory_space<vmem>>, %arg5: memref<1x256xf32, #tpu.memory_space<vmem>>) attributes {dimension_semantics = [#tpu.dimension_semantics<parallel>], iteration_bounds = array<i64: 6>, scalar_prefetch = 0 : i64, scratch_operands = 0 : i64, tpu.core_type = #tpu.core_type<tc>, window_params = [{transform_indices = @transform_0, window_bounds = array<i64: 5, 256>}, {pipeline_mode = #tpu.pipeline_mode<synchronous>, transform_indices = @transform_1, window_bounds = array<i64: 17, 5>}, {pipeline_mode = #tpu.pipeline_mode<synchronous>, transform_indices = @transform_2, window_bounds = array<i64: 33, 17>}, {pipeline_mode = #tpu.pipeline_mode<synchronous>, transform_indices = @transform_3, window_bounds = array<i64: 1, 33>}, {transform_indices = @transform_4, window_bounds = array<i64: 1, 256>}]} {
    %c0 = arith.constant 0 : index
    %c0_0 = arith.constant 0 : index
    %0 = vector.load %arg1[%c0, %c0_0] : memref<5x256xbf16, #tpu.memory_space<vmem>>, vector<5x256xbf16>
    %c0_1 = arith.constant 0 : index
    %c0_2 = arith.constant 0 : index
    %1 = vector.load %arg2[%c0_1, %c0_2] : memref<17x5xbf16, #tpu.memory_space<vmem>>, vector<17x5xbf16>
    %cst = arith.constant dense<0.000000e+00> : vector<17x256xf32>
    %2 = tpu.matmul %1, %0, %cst {dimension_numbers = #tpu.dot_dimension_numbers<[1], [0], [0], [1], [0, 0, 1, 1], [], []>} : vector<17x5xbf16>, vector<5x256xbf16>, vector<17x256xf32> -> vector<17x256xf32>
    %cst_3 = arith.constant 0.000000e+00 : f32
    %3 = vector.broadcast %cst_3 : f32 to vector<17x256xf32>
    %4 = arith.maximumf %2, %3 : vector<17x256xf32>
    %c0_4 = arith.constant 0 : index
    %c0_5 = arith.constant 0 : index
    %5 = vector.load %arg3[%c0_4, %c0_5] : memref<33x17xbf16, #tpu.memory_space<vmem>>, vector<33x17xbf16>
    %6 = arith.truncf %4 : vector<17x256xf32> to vector<17x256xbf16>
    %cst_6 = arith.constant dense<0.000000e+00> : vector<33x256xf32>
    %7 = tpu.matmul %5, %6, %cst_6 {dimension_numbers = #tpu.dot_dimension_numbers<[1], [0], [0], [1], [0, 0, 1, 1], [], []>} : vector<33x17xbf16>, vector<17x256xbf16>, vector<33x256xf32> -> vector<33x256xf32>
    %cst_7 = arith.constant 0.000000e+00 : f32
    %8 = vector.broadcast %cst_7 : f32 to vector<33x256xf32>
    %9 = arith.maximumf %7, %8 : vector<33x256xf32>
    %c0_8 = arith.constant 0 : index
    %c0_9 = arith.constant 0 : index
    %10 = vector.load %arg4[%c0_8, %c0_9] : memref<1x33xbf16, #tpu.memory_space<vmem>>, vector<1x33xbf16>
    %11 = arith.truncf %9 : vector<33x256xf32> to vector<33x256xbf16>
    %cst_10 = arith.constant dense<0.000000e+00> : vector<1x256xf32>
    %12 = tpu.matmul %10, %11, %cst_10 {dimension_numbers = #tpu.dot_dimension_numbers<[1], [0], [0], [1], [0, 0, 1, 1], [], []>} : vector<1x33xbf16>, vector<33x256xbf16>, vector<1x256xf32> -> vector<1x256xf32>
    %c0_11 = arith.constant 0 : index
    %c0_12 = arith.constant 0 : index
    %13 = vector.load %arg5[%c0_11, %c0_12] : memref<1x256xf32, #tpu.memory_space<vmem>>, vector<1x256xf32>
    tpu.vector_store %arg5[%c0_11, %c0_12], %12 {strides = array<i32>} : memref<1x256xf32, #tpu.memory_space<vmem>>, vector<1x256xf32>,
    return
  }
  func.func @transform_0(%arg0: i32) -> (i32, i32) {
    %c0_i32 = arith.constant 0 : i32
    %c0_i32_0 = arith.constant 0 : i32
    return %c0_i32, %arg0 : i32, i32
  }
  func.func @transform_1(%arg0: i32) -> (i32, i32) {
    %c0_i32 = arith.constant 0 : i32
    %c0_i32_0 = arith.constant 0 : i32
    %c0_i32_1 = arith.constant 0 : i32
    return %c0_i32, %c0_i32_0 : i32, i32
  }
  func.func @transform_2(%arg0: i32) -> (i32, i32) {
    %c0_i32 = arith.constant 0 : i32
    %c0_i32_0 = arith.constant 0 : i32
    %c0_i32_1 = arith.constant 0 : i32
    return %c0_i32, %c0_i32_0 : i32, i32
  }
  func.func @transform_3(%arg0: i32) -> (i32, i32) {
    %c0_i32 = arith.constant 0 : i32
    %c0_i32_0 = arith.constant 0 : i32
    %c0_i32_1 = arith.constant 0 : i32
    return %c0_i32, %c0_i32_0 : i32, i32
  }
  func.func @transform_4(%arg0: i32) -> (i32, i32) {
    %c0_i32 = arith.constant 0 : i32
    %c0_i32_0 = arith.constant 0 : i32
    return %c0_i32, %arg0 : i32, i32
  }
}

</mosaic_0001>

<llo_original>
// kernel: tpu_custom_call.1
$region0: #{tpu_custom_call.1}
  #allocation0 [shape = 'u32[]', space=smem, size = 0x4, offset = 0x4, fixed_abs, tag = 'smem constant byte address 0x4 - core index']
  #allocation1 [shape = 'u32[144,128]{1,0:T(1,128)}', space=vmem, size = 0x12000, scoped, tag = 'internal scratch']
  %s0 = inlined_call_operand.vmem [shape: bf16[5,1536], index: 0, kind: input, shape index: {}]
  %s1 = inlined_call_operand.vmem [shape: bf16[17,5], index: 1, kind: input, shape index: {}]
  %s2 = inlined_call_operand.vmem [shape: bf16[33,17], index: 2, kind: input, shape index: {}]
  %s3 = inlined_call_operand.vmem [shape: bf16[1,33], index: 3, kind: input, shape index: {}]
  %s4 = inlined_call_operand.hbm [shape: f32[1,1536], index: 4, kind: output, shape index: {}]
  %s5 = sld [smem:[#allocation0]]
  $region49: #{tpu_custom_call.1} parent=0
    _
  %s7 = ssub.s32 1, %s5
  %s8 = scalar_select 0, %s7, %s5
  $region1: #{tpu_custom_call.1} parent=0
    #allocation2 [shape = 'u8[2048]{0}', space=vmem, size = 0x800, scoped, tag = 'output window, operand 0']
    #allocation3 [shape = 's32[2]{0}', space=sflag, size = 0x8, scoped, tag = 'scoped memory for tpu_custom_call.1']
    %9 = vsyncpa [#allocation3], 0
    %s10 = scalar_lea.sflag [#allocation3], 1
    %11 = vsyncpa %s10, 0
    loop: start=0, step=1, limit=8
    $region2: #{tpu_custom_call.1} parent=1 // loop_pre_header
      _
    $region3: #{tpu_custom_call.1} parent=1 // loop_header
      %s13 = sphi 0, %s17
      %p14 = scmp.ge.s32.totalorder %s13, 8
      %s23 = sphi 0, %s25
      %s26 = sphi 0, %s23
      %s27 = sphi 0, %s26
      %s43 = sphi 0, %s27
      %s47 = sphi 0, %s47
      %s49 = sphi 0, %s47
      %s50 = sphi 0, %s49
      %s64 = sphi 0, %s50
      %s68 = sphi 0, %s68
      %s70 = sphi 0, %s68
      %s71 = sphi 0, %s70
      %s85 = sphi 0, %s71
      %s89 = sphi 0, %s89
      %s91 = sphi 0, %s89
      %s92 = sphi 0, %s91
      %s106 = sphi 0, %s92
      %s112 = sphi 0, %s114
      %s115 = sphi 0, %s112
      %s116 = sphi 0, %s115
      %s132 = sphi 0, %s116
    $region4: #{tpu_custom_call.1} parent=1 // loop_header_branch
      %16 = sbr.rel (%p14) target = $region8
    $region5: #{tpu_custom_call.1} parent=1 // loop_body
      %s18 = ssub.s32 %s13, 1
      %s19 = ssub.s32 %s13, 2
      %s20 = sadd.s32 %s13, 1
      %s21 = ssub.s32 %s13, %s20
      %p22 = scmp.eq.s32.totalorder %s21, 0
      %s24 = sadd.s32 %s23, 1
      %s25 = scalar_select %p22, %s23, %s24
      %p28 = pneg %p22
      %p29 = scmp.eq.s32.totalorder %s13, 5
      %p30 = por %p28, %p29
      %p31 = scmp.ne.s32.totalorder %s23, %s26
      %p32 = scmp.eq.s32.totalorder %s13, 0
      %p33 = por %p31, %p32
      %p34 = scmp.ne.s32.totalorder %s23, %s26
      %p35 = scmp.eq.s32.totalorder %s18, 5
      %p36 = por %p34, %p35
      %p37 = scmp.ne.s32.totalorder %s26, %s27
      %p38 = scmp.eq.s32.totalorder %s18, 0
      %p39 = por %p37, %p38
      %p40 = scmp.ne.s32.totalorder %s26, %s27
      %p41 = scmp.eq.s32.totalorder %s19, 5
      %p42 = por %p40, %p41
      %p44 = scmp.ne.s32.totalorder %s27, %s43
      %p45 = scmp.eq.s32.totalorder %s19, 0
      %p46 = por %p44, %p45
      %s48 = sadd.s32 %s47, 1
      %p51 = scmp.eq.s32.totalorder %s13, 5
      %p52 = scmp.ne.s32.totalorder %s47, %s49
      %p53 = scmp.eq.s32.totalorder %s13, 0
      %p54 = por %p52, %p53
      %p55 = scmp.ne.s32.totalorder %s47, %s49
      %p56 = scmp.eq.s32.totalorder %s18, 5
      %p57 = por %p55, %p56
      %p58 = scmp.ne.s32.totalorder %s49, %s50
      %p59 = scmp.eq.s32.totalorder %s18, 0
      %p60 = por %p58, %p59
      %p61 = scmp.ne.s32.totalorder %s49, %s50
      %p62 = scmp.eq.s32.totalorder %s19, 5
      %p63 = por %p61, %p62
      %p65 = scmp.ne.s32.totalorder %s50, %s64
      %p66 = scmp.eq.s32.totalorder %s19, 0
      %p67 = por %p65, %p66
      %s69 = sadd.s32 %s68, 1
      %p72 = scmp.eq.s32.totalorder %s13, 5
      %p73 = scmp.ne.s32.totalorder %s68, %s70
      %p74 = scmp.eq.s32.totalorder %s13, 0
      %p75 = por %p73, %p74
      %p76 = scmp.ne.s32.totalorder %s68, %s70
      %p77 = scmp.eq.s32.totalorder %s18, 5
      %p78 = por %p76, %p77
      %p79 = scmp.ne.s32.totalorder %s70, %s71
      %p80 = scmp.eq.s32.totalorder %s18, 0
      %p81 = por %p79, %p80
      %p82 = scmp.ne.s32.totalorder %s70, %s71
      %p83 = scmp.eq.s32.totalorder %s19, 5
      %p84 = por %p82, %p83
      %p86 = scmp.ne.s32.totalorder %s71, %s85
      %p87 = scmp.eq.s32.totalorder %s19, 0
      %p88 = por %p86, %p87
      %s90 = sadd.s32 %s89, 1
      %p93 = scmp.eq.s32.totalorder %s13, 5
      %p94 = scmp.ne.s32.totalorder %s89, %s91
      %p95 = scmp.eq.s32.totalorder %s13, 0
      %p96 = por %p94, %p95
      %p97 = scmp.ne.s32.totalorder %s89, %s91
      %p98 = scmp.eq.s32.totalorder %s18, 5
      %p99 = por %p97, %p98
      %p100 = scmp.ne.s32.totalorder %s91, %s92
      %p101 = scmp.eq.s32.totalorder %s18, 0
      %p102 = por %p100, %p101
      %p103 = scmp.ne.s32.totalorder %s91, %s92
      %p104 = scmp.eq.s32.totalorder %s19, 5
      %p105 = por %p103, %p104
      %p107 = scmp.ne.s32.totalorder %s92, %s106
      %p108 = scmp.eq.s32.totalorder %s19, 0
      %p109 = por %p107, %p108
      %s110 = ssub.s32 %s13, %s20
      %p111 = scmp.eq.s32.totalorder %s110, 0
      %s113 = sadd.s32 %s112, 1
      %s114 = scalar_select %p111, %s112, %s113
      %p117 = pneg %p111
      %p118 = scmp.eq.s32.totalorder %s13, 5
      %p119 = por %p117, %p118
      %p120 = scmp.ne.s32.totalorder %s112, %s115
      %p121 = scmp.eq.s32.totalorder %s13, 0
      %p122 = por %p120, %p121
      %p123 = scmp.ne.s32.totalorder %s112, %s115
      %p124 = scmp.eq.s32.totalorder %s18, 5
      %p125 = por %p123, %p124
      %p126 = scmp.ne.s32.totalorder %s115, %s116
      %p127 = scmp.eq.s32.totalorder %s18, 0
      %p128 = por %p126, %p127
      %p129 = scmp.ne.s32.totalorder %s115, %s116
      %p130 = scmp.eq.s32.totalorder %s19, 5
      %p131 = por %p129, %p130
      %p133 = scmp.ne.s32.totalorder %s116, %s132
      %p134 = scmp.eq.s32.totalorder %s19, 0
      %p135 = por %p133, %p134
      %p136 = scmp.le.s32.totalorder 1, %s13
      %p137 = scmp.lt.s32.totalorder %s13, 7
      %p138 = pnand %p136, %p137
      %p139 = pneg %p138
      // Predicated region
      $region9: #{tpu_custom_call.1} parent=5 // pred_check
        _
      $region10: #{tpu_custom_call.1} parent=5 // pred_check_branch
        %141 = sbr.rel (%p138) target = $region12
      $region11: #{tpu_custom_call.1} parent=5 // pred_region
        %s142 = ssub.s32 %s13, 1
        // Predicated region
        $region13: #{tpu_custom_call.1} parent=11 // pred_check
          %p143 = pneg %p60
        $region14: #{tpu_custom_call.1} parent=11 // pred_check_branch
          %145 = sbr.rel (%p143) target = $region16
        $region15: #{tpu_custom_call.1} parent=11 // pred_region
          _
        $region16: #{tpu_custom_call.1} parent=11 // pred_fallthru
          _
        // Predicated region
        $region17: #{tpu_custom_call.1} parent=11 // pred_check
          %p146 = pneg %p81
        $region18: #{tpu_custom_call.1} parent=11 // pred_check_branch
          %148 = sbr.rel (%p146) target = $region20
        $region19: #{tpu_custom_call.1} parent=11 // pred_region
          _
        $region20: #{tpu_custom_call.1} parent=11 // pred_fallthru
          _
        // Predicated region
        $region21: #{tpu_custom_call.1} parent=11 // pred_check
          %p149 = pneg %p102
        $region22: #{tpu_custom_call.1} parent=11 // pred_check_branch
          %151 = sbr.rel (%p149) target = $region24
        $region23: #{tpu_custom_call.1} parent=11 // pred_region
          _
        $region24: #{tpu_custom_call.1} parent=11 // pred_fallthru
          _
      $region12: #{tpu_custom_call.1} parent=5 // pred_fallthru
        _
      %p152 = scmp.lt.s32.totalorder %s13, 6
      // Predicated region
      $region25: #{tpu_custom_call.1} parent=5 // pred_check
        %p153 = pneg %p152
      $region26: #{tpu_custom_call.1} parent=5 // pred_check_branch
        %155 = sbr.rel (%p153) target = $region28
      $region27: #{tpu_custom_call.1} parent=5 // pred_region
        // Predicated region
        $region29: #{tpu_custom_call.1} parent=27 // pred_check
          %p156 = pneg %p33
        $region30: #{tpu_custom_call.1} parent=27 // pred_check_branch
          %158 = sbr.rel (%p156) target = $region32
        $region31: #{tpu_custom_call.1} parent=27 // pred_region
          %s159 = smul.u32 2, %s13
          %p160 = scmp.lt.s32.totalorder %s159, 11
          %s161 = scalar_select %p160, %s159, 11
          %s162 = smul.addr %s161, 4
          %s163 = scalar_lea.vmem %s0, %s162
          %s164 = smul.u32 2, %s13
        $region32: #{tpu_custom_call.1} parent=27 // pred_fallthru
          _
      $region28: #{tpu_custom_call.1} parent=5 // pred_fallthru
        _
      %p165 = scmp.le.s32.totalorder 1, %s13
      %p166 = scmp.lt.s32.totalorder %s13, 7
      %p167 = pnand %p165, %p166
      %p168 = pneg %p167
      // Predicated region
      $region33: #{tpu_custom_call.1} parent=5 // pred_check
        _
      $region34: #{tpu_custom_call.1} parent=5 // pred_check_branch
        %170 = sbr.rel (%p167) target = $region36
      $region35: #{tpu_custom_call.1} parent=5 // pred_region
        %s171 = ssub.s32 %s13, 1
        %s172 = smul.u32 2, %s18
        %p173 = scmp.lt.s32.totalorder %s172, 11
        %s174 = scalar_select %p173, %s172, 11
        %s175 = smul.addr %s174, 4
        %s176 = scalar_lea.vmem %s0, %s175
        %p177 = pneg %p39
        %p178 = pneg %p36
        %p179 = pneg %p60
        %p180 = pneg %p57
        %p181 = pneg %p81
        %p182 = pneg %p78
        %p183 = pneg %p102
        %p184 = pneg %p99
        %p185 = pneg %p128
        %p186 = pneg %p125
        %s187 = sand.u32 %s115, 1
        %s188 = scalar_lea.sflag [#allocation3], %s187
        %s189 = sand.u32 %s115, 1
        %s190 = smul.addr %s189, 2
        %s191 = scalar_lea.vmem [#allocation2], %s190
        %s192 = smul.u32 2, %s18
        %p193 = scmp.lt.s32.totalorder %s192, 11
        %s194 = scalar_select %p193, %s192, 11
        %s195 = smul.addr %s194, 4
        %s196 = scalar_lea.vmem %s0, %s195
        %s197 = smul.u32 2, %s18
        %s198 = smul.u32 2, %s18
        %v200 = vld [vmem:[%s196] sm:$0x77]
        %v201 = vld [vmem:[%s1] sm:$0xf]
        %v202 = vld [vmem:[%s1 + $0x4] sm:$0xf]
        %v203 = vld [vmem:[%s1 + $0x8] sm:$0x1]
        %v207 = vunpack.c.l.b16 %v201
        %v208 = vunpack.c.l.b16 %v202
        %v209 = vunpack.c.l.b16 %v203
        %v210 = vpack.c.b16 %v208, %v207
        %v211 = vpack.c.b16 %v209, %v209
        %v213 = vunpack.c.l.b16 %v200
        %v214 = vunpack.c.h.b16 %v200
        %v215 = vpack.c.b16 %v213, %v213
        %v216 = vpack.c.b16 %v214, %v214
        %vm217 = vcmask 39936
        %v219 = vsel %vm217, %v210, 0
        %v222 = vsel %vm217, %v211, 0
        %vm224 = vcmask 1041408
        %vm225 = vcmask 1042432
        %v226 = vsel %vm224, 4294967295, 65535
        %v227 = vsel %vm225, %v226, 0
        %v229 = vand.u32 %v215, %v227
        %v232 = vand.u32 %v216, %v227
        %234 = vmatprep.subr.bf16.mxu0 %v232
        %235 = vmatpush1.bf16.msra.mxu0 %v229
        %236 = vmatprep.subr.bf16.mxu0 0
        %237 = vmatpush1.bf16.msra.mxu0 0
        %238 = vmatprep.subr.bf16.mxu0 0
        %239 = vmatpush1.bf16.msra.mxu0 0
        %240 = vmatprep.subr.bf16.mxu0 0
        %241 = vmatpush1.bf16.msra.mxu0 0
        %242 = vmatprep.subr.bf16.mxu0 0
        %243 = vmatpush1.bf16.msra.mxu0 0
        %244 = vmatprep.subr.bf16.mxu0 0
        %245 = vmatpush1.bf16.msra.mxu0 0
        %246 = vmatprep.subr.bf16.mxu0 0
        %247 = vmatpush1.bf16.msra.mxu0 0
        %248 = vmatprep.subr.bf16.mxu0 0
        %249 = vmatpush1.bf16.msra.mxu0 0
        %250 = vmatprep.subr.bf16.mxu0 0
        %251 = vmatpush1.bf16.msra.mxu0 0
        %252 = vmatprep.subr.bf16.mxu0 0
        %253 = vmatpush1.bf16.msra.mxu0 0
        %254 = vmatprep.subr.bf16.mxu0 0
        %255 = vmatpush1.bf16.msra.mxu0 0
        %256 = vmatprep.subr.bf16.mxu0 0
        %257 = vmatpush1.bf16.msra.mxu0 0
        %258 = vmatprep.subr.bf16.mxu0 0
        %259 = vmatpush1.bf16.msra.mxu0 0
        %260 = vmatprep.subr.bf16.mxu0 0
        %261 = vmatpush1.bf16.msra.mxu0 0
        %262 = vmatprep.subr.bf16.mxu0 0
        %263 = vmatpush1.bf16.msra.mxu0 0
        %264 = vmatprep.subr.bf16.mxu0 0
        %265 = vmatpush1.bf16.msra.mxu0 0
        %266 = vmatprep.mubr.bf16.mxu0 0
        %267 = vmatmul.mubr.bf16.gmra.mrb[0].mxu0 %v219
        %v268 = vpop.f32.mrb[0].mxu0
        %v269 = vadd.f32 0.0, %v268
        %v270 = vpop.f32.mrb[0].mxu0
        %v271 = vadd.f32 0.0, %v270
        %v272 = vpop.f32.mrb[0].mxu0
        %v273 = vadd.f32 0.0, %v272
        %v274 = vpop.f32.mrb[0].mxu0
        %v275 = vadd.f32 0.0, %v274
        %276 = vmatprep.mubr.bf16.mxu0 0
        %277 = vmatmul.mubr.bf16.gmra.mrb[0].mxu0 %v222
        %v278 = vpop.f32.mrb[0].mxu0
        %v279 = vadd.f32 0.0, %v278
        %v280 = vpop.f32.mrb[0].mxu0
        %v281 = vadd.f32 0.0, %v280
        %v282 = vpop.f32.mrb[0].mxu0
        %v283 = vpop.f32.mrb[0].mxu0
        %284 = vdwg.mxu0
        %v285 = vmax.f32 %v269, 0.0
        %v286 = vmax.f32 %v271, 0.0
        %v287 = vmax.f32 %v273, 0.0
        %v288 = vmax.f32 %v275, 0.0
        %v289 = vmax.f32 %v279, 0.0
        %v290 = vmax.f32 %v281, 0.0
        %v291 = vld [vmem:[%s2] sm:$0xf]
        %v292 = vld [vmem:[%s2 + $0x4] sm:$0xf]
        %v293 = vld [vmem:[%s2 + $0x8] sm:$0xf]
        %v294 = vld [vmem:[%s2 + $0xc] sm:$0xf]
        %v295 = vld [vmem:[%s2 + $0x10] sm:$0x1]
        %v296 = vpack.c.bf16 %v287, %v285
        %v297 = vpack.c.bf16 %v288, %v286
        %v298 = vpack.c.bf16 %v289, %v289
        %v299 = vpack.c.bf16 %v290, %v290
        %v305 = vunpack.c.l.b16 %v291
        %v306 = vunpack.c.l.b16 %v292
        %v307 = vunpack.c.l.b16 %v293
        %v308 = vunpack.c.l.b16 %v294
        %v309 = vunpack.c.l.b16 %v295
        %v310 = vpack.c.b16 %v306, %v305
        %v311 = vpack.c.b16 %v308, %v307
        %v312 = vpack.c.b16 %v309, %v309
        %vm313 = vcmask 138240
        %v315 = vsel %vm313, %v310, 0
        %v318 = vsel %vm313, %v311, 0
        %v321 = vsel %vm313, %v312, 0
        %vm323 = vcmask 1040384
        %v324 = vsel 0, 4294967295, 65535
        %v325 = vsel %vm323, %v324, 0
        %v327 = vand.u32 %v298, %v325
        %v330 = vand.u32 %v299, %v325
        %332 = vmatprep.subr.bf16.mxu0 %v297
        %333 = vmatpush1.bf16.msra.mxu0 %v296
        %334 = vmatprep.subr.bf16.mxu0 %v330
        %335 = vmatpush1.bf16.msra.mxu0 %v327
        %336 = vmatprep.subr.bf16.mxu0 0
        %337 = vmatpush1.bf16.msra.mxu0 0
        %338 = vmatprep.subr.bf16.mxu0 0
        %339 = vmatpush1.bf16.msra.mxu0 0
        %340 = vmatprep.subr.bf16.mxu0 0
        %341 = vmatpush1.bf16.msra.mxu0 0
        %342 = vmatprep.subr.bf16.mxu0 0
        %343 = vmatpush1.bf16.msra.mxu0 0
        %344 = vmatprep.subr.bf16.mxu0 0
        %345 = vmatpush1.bf16.msra.mxu0 0
        %346 = vmatprep.subr.bf16.mxu0 0
        %347 = vmatpush1.bf16.msra.mxu0 0
        %348 = vmatprep.subr.bf16.mxu0 0
        %349 = vmatpush1.bf16.msra.mxu0 0
        %350 = vmatprep.subr.bf16.mxu0 0
        %351 = vmatpush1.bf16.msra.mxu0 0
        %352 = vmatprep.subr.bf16.mxu0 0
        %353 = vmatpush1.bf16.msra.mxu0 0
        %354 = vmatprep.subr.bf16.mxu0 0
        %355 = vmatpush1.bf16.msra.mxu0 0
        %356 = vmatprep.subr.bf16.mxu0 0
        %357 = vmatpush1.bf16.msra.mxu0 0
        %358 = vmatprep.subr.bf16.mxu0 0
        %359 = vmatpush1.bf16.msra.mxu0 0
        %360 = vmatprep.subr.bf16.mxu0 0
        %361 = vmatpush1.bf16.msra.mxu0 0
        %362 = vmatprep.subr.bf16.mxu0 0
        %363 = vmatpush1.bf16.msra.mxu0 0
        %364 = vmatprep.mubr.bf16.mxu0 0
        %365 = vmatmul.mubr.bf16.gmra.mrb[0].mxu0 %v315
        %v366 = vpop.f32.mrb[0].mxu0
        %v367 = vadd.f32 0.0, %v366
        %v368 = vpop.f32.mrb[0].mxu0
        %v369 = vadd.f32 0.0, %v368
        %v370 = vpop.f32.mrb[0].mxu0
        %v371 = vadd.f32 0.0, %v370
        %v372 = vpop.f32.mrb[0].mxu0
        %v373 = vadd.f32 0.0, %v372
        %374 = vmatprep.mubr.bf16.mxu0 0
        %375 = vmatmul.mubr.bf16.gmra.mrb[0].mxu0 %v318
        %v376 = vpop.f32.mrb[0].mxu0
        %v377 = vadd.f32 0.0, %v376
        %v378 = vpop.f32.mrb[0].mxu0
        %v379 = vadd.f32 0.0, %v378
        %v380 = vpop.f32.mrb[0].mxu0
        %v381 = vadd.f32 0.0, %v380
        %v382 = vpop.f32.mrb[0].mxu0
        %v383 = vadd.f32 0.0, %v382
        %384 = vmatprep.mubr.bf16.mxu0 0
        %385 = vmatmul.mubr.bf16.gmra.mrb[0].mxu0 %v321
        %v386 = vpop.f32.mrb[0].mxu0
        %v387 = vadd.f32 0.0, %v386
        %v388 = vpop.f32.mrb[0].mxu0
        %v389 = vadd.f32 0.0, %v388
        %v390 = vpop.f32.mrb[0].mxu0
        %v391 = vpop.f32.mrb[0].mxu0
        %392 = vdwg.mxu0
        %v393 = vmax.f32 %v367, 0.0
        %v394 = vmax.f32 %v369, 0.0
        %v395 = vmax.f32 %v371, 0.0
        %v396 = vmax.f32 %v373, 0.0
        %v397 = vmax.f32 %v377, 0.0
        %v398 = vmax.f32 %v379, 0.0
        %v399 = vmax.f32 %v381, 0.0
        %v400 = vmax.f32 %v383, 0.0
        %v401 = vmax.f32 %v387, 0.0
        %v402 = vmax.f32 %v389, 0.0
        %v403 = vld [vmem:[%s3] sm:$0x1]
        %v404 = vpack.c.bf16 %v395, %v393
        %v405 = vpack.c.bf16 %v396, %v394
        %v406 = vpack.c.bf16 %v399, %v397
        %v407 = vpack.c.bf16 %v400, %v398
        %v408 = vpack.c.bf16 %v401, %v401
        %v409 = vpack.c.bf16 %v402, %v402
        %vm410 = vcmask 269312
        %v412 = vsel %vm410, %v403, 0
        %v415 = vand.u32 %v408, %v325
        %v418 = vand.u32 %v409, %v325
        %420 = vmatprep.subr.bf16.mxu0 %v405
        %421 = vmatpush1.bf16.msra.mxu0 %v404
        %422 = vmatprep.subr.bf16.mxu0 %v407
        %423 = vmatpush1.bf16.msra.mxu0 %v406
        %424 = vmatprep.subr.bf16.mxu0 %v418
        %425 = vmatpush1.bf16.msra.mxu0 %v415
        %426 = vmatprep.subr.bf16.mxu0 0
        %427 = vmatpush1.bf16.msra.mxu0 0
        %428 = vmatprep.subr.bf16.mxu0 0
        %429 = vmatpush1.bf16.msra.mxu0 0
        %430 = vmatprep.subr.bf16.mxu0 0
        %431 = vmatpush1.bf16.msra.mxu0 0
        %432 = vmatprep.subr.bf16.mxu0 0
        %433 = vmatpush1.bf16.msra.mxu0 0
        %434 = vmatprep.subr.bf16.mxu0 0
        %435 = vmatpush1.bf16.msra.mxu0 0
        %436 = vmatprep.subr.bf16.mxu0 0
        %437 = vmatpush1.bf16.msra.mxu0 0
        %438 = vmatprep.subr.bf16.mxu0 0
        %439 = vmatpush1.bf16.msra.mxu0 0
        %440 = vmatprep.subr.bf16.mxu0 0
        %441 = vmatpush1.bf16.msra.mxu0 0
        %442 = vmatprep.subr.bf16.mxu0 0
        %443 = vmatpush1.bf16.msra.mxu0 0
        %444 = vmatprep.subr.bf16.mxu0 0
        %445 = vmatpush1.bf16.msra.mxu0 0
        %446 = vmatprep.subr.bf16.mxu0 0
        %447 = vmatpush1.bf16.msra.mxu0 0
        %448 = vmatprep.subr.bf16.mxu0 0
        %449 = vmatpush1.bf16.msra.mxu0 0
        %450 = vmatprep.subr.bf16.mxu0 0
        %451 = vmatpush1.bf16.msra.mxu0 0
        %452 = vmatprep.mubr.bf16.mxu0 0
        %453 = vmatmul.mubr.bf16.gmra.mrb[0].mxu0 %v412
        %v454 = vpop.f32.mrb[0].mxu0
        %v455 = vadd.f32 0.0, %v454
        %v456 = vpop.f32.mrb[0].mxu0
        %v457 = vadd.f32 0.0, %v456
        %v458 = vpop.f32.mrb[0].mxu0
        %v459 = vpop.f32.mrb[0].mxu0
        %460 = vdwg.mxu0
        %v463 = vcombine.low %v455, %v457
        %v465 = vunpack.c.l.s4 1966171168
        %v466 = vunpack.c.0.s8 %v465
        %v467 = vlaneseq
        %v468 = vshrl.u32 %v467, 7
        %v469 = vsub.s32 %v466, %v468
        %v470 = vrot.slane %v463, %v469
        %v472 = vunpack.c.l.s4 1966171168
        %v473 = vunpack.c.0.s8 %v472
        %v474 = vlaneseq
        %v475 = vshrl.u32 %v474, 7
        %v476 = vsub.s32 %v473, %v475
        %v477 = vrot.slane %v470, %v476
        %v479 = vlaneseq
        %vm480 = vcmp.ge.s32.totalorder %v479, 0
        %vm481 = vcmp.lt.s32.totalorder %v479, 256
        %vm482 = vmand %vm480, %vm481
        %483 = vst.msk [vmem:[%s191] sm:$0x3] %vm482, %v477
        %s484 = sand.u32 %s115, 1
        %s485 = scalar_lea.sflag [#allocation3], %s484
        %s486 = sand.u32 %s115, 1
        %s487 = smul.addr %s486, 2
        %s488 = scalar_lea.vmem [#allocation2], %s487
        // Predicated region
        $region37: #{tpu_custom_call.1} parent=35 // pred_check
          %p489 = pneg %p125
        $region38: #{tpu_custom_call.1} parent=35 // pred_check_branch
          %491 = sbr.rel (%p489) target = $region40
        $region39: #{tpu_custom_call.1} parent=35 // pred_region
          %s492 = smul.u32 2, %s18
          %s494 = ssub.s32 32, 32
          %495 = vsyncadd %s485, %s494
          %s496 = smul.addr %s492, 16
          %s497 = scalar_lea.hbm %s4, %s496
          %s499 = sshll.u32 %s488, 4
          %s500 = int_to_ptr.vmem [resolvable:$true] %s499
          %502 = dma.vmem_to_hbm [thread:$0]  %s500, 32, %s497, %s485
        $region40: #{tpu_custom_call.1} parent=35 // pred_fallthru
          _
      $region36: #{tpu_custom_call.1} parent=5 // pred_fallthru
        _
      %p503 = scmp.le.s32.totalorder 2, %s13
      // Predicated region
      $region41: #{tpu_custom_call.1} parent=5 // pred_check
        %p504 = pneg %p503
      $region42: #{tpu_custom_call.1} parent=5 // pred_check_branch
        %506 = sbr.rel (%p504) target = $region44
      $region43: #{tpu_custom_call.1} parent=5 // pred_region
        %s507 = ssub.s32 %s13, 2
        // Predicated region
        $region45: #{tpu_custom_call.1} parent=43 // pred_check
          %p508 = pneg %p131
        $region46: #{tpu_custom_call.1} parent=43 // pred_check_branch
          %510 = sbr.rel (%p508) target = $region48
        $region47: #{tpu_custom_call.1} parent=43 // pred_region
          %s511 = sand.u32 %s116, 1
          %s512 = scalar_lea.sflag [#allocation3], %s511
          %s513 = sand.u32 %s116, 1
          %s514 = smul.addr %s513, 2
          %s515 = scalar_lea.vmem [#allocation2], %s514
          %516 = dma.done %s512, 32
        $region48: #{tpu_custom_call.1} parent=43 // pred_fallthru
          _
      $region44: #{tpu_custom_call.1} parent=5 // pred_fallthru
        _
    $region6: #{tpu_custom_call.1} parent=1 // loop_footer
      %s17 = sadd.s32 1, %s13
    $region7: #{tpu_custom_call.1} parent=1 // loop_footer_branch
      %12 = sbr.rel target = $region3
    $region8: #{tpu_custom_call.1} parent=1 // loop_exit
      _
    %517 = vsyncpa [#allocation3], 1
    %s518 = scalar_lea.sflag [#allocation3], 1
    %519 = vsyncpa %s518, 1

</llo_original>
